<compile_context>
chip_gen: v6e
topology: v6e:2x2x1
jax: 0.10.0
libtpu: 0.0.40
codegen_flags: <defaults>
</compile_context>

<pallas_src>
import functools

import jax
import jax.numpy as jnp
from jax.experimental import pallas as pl
from jax.experimental.pallas import tpu as pltpu

LANES = 128          # lane width (last dim)
MAX_TILE_R = 8192    # sublane rows per grid step (8192*128*4B = 4 MiB / f32 input tile)


def _bce_kernel(o_ref, t_ref, out_ref, *, nw0, nw1, clamp, n_rows, tile_r,
                binary_targets):
    # Upcast in-kernel so bf16 inputs stream at half the HBM bytes.
    x = o_ref[...].astype(jnp.float32)
    t = t_ref[...].astype(jnp.float32)

    # output = clamp(output, 1e-7, 1 - 1e-7)
    x = jnp.clip(x, 1e-7, 1.0 - 1e-7)

    if binary_targets:
        # Single-log fast path (valid when targets are exactly 0/1).
        t_pos = t > 0.5
        lg = jnp.log(jnp.where(t_pos, x, 1.0 - x))
        if clamp:
            lg = jnp.maximum(lg, -100.0)
        contrib = jnp.where(t_pos, nw0, nw1) * lg
    else:
        log0 = jnp.log(x)
        log1 = jnp.log(1.0 - x)
        if clamp:
            log0 = jnp.maximum(log0, -100.0)
            log1 = jnp.maximum(log1, -100.0)
        # -(w0*t*log0 + w1*(1-t)*log1)  with nw0=-w0, nw1=-w1:
        a = nw0 * log0
        b = nw1 * log1
        contrib = b + t * (a - b)

    i = pl.program_id(0)
    is_last = i == pl.num_programs(0) - 1

    # Hot path: every block except the last is fully valid -> no mask work.
    @pl.when(jnp.logical_not(is_last))
    def _():
        out_ref[...] = jnp.sum(contrib, axis=0, keepdims=True)

    # Only the last block can contain out-of-range (undefined) rows by
    # construction; mask them with a block-relative index.
    @pl.when(is_last)
    def _():
        rem = (n_rows - i * tile_r) * LANES          # valid elems in this block
        row_ids = jax.lax.broadcasted_iota(jnp.int32, (tile_r, LANES), 0)
        lane_ids = jax.lax.broadcasted_iota(jnp.int32, (tile_r, LANES), 1)
        idx = row_ids * LANES + lane_ids
        out_ref[...] = jnp.sum(jnp.where(idx < rem, contrib, 0.0),
                               axis=0, keepdims=True)


def _bce_terms(x, t, nw0, nw1, clamp):
    """Plain-jnp per-element -loss terms (used for the <128-element tail)."""
    x = jnp.clip(x.astype(jnp.float32), 1e-7, 1.0 - 1e-7)
    log0 = jnp.log(x)
    log1 = jnp.log(1.0 - x)
    if clamp:
        log0 = jnp.maximum(log0, -100.0)
        log1 = jnp.maximum(log1, -100.0)
    t = t.astype(jnp.float32)
    a = nw0 * log0
    b = nw1 * log1
    return b + t * (a - b)


def bce_loss(output, target, weights=(1.0, 1.0), clamp=True,
             binary_targets=False, max_tile_r=MAX_TILE_R):
    """Weighted BCE with mean reduction, matching the PyTorch BCELoss module."""
    assert output.shape == target.shape
    n = output.size
    nw0 = -float(weights[0])
    nw1 = -float(weights[1])

    flat_o = output.reshape(-1)
    flat_t = target.reshape(-1)

    n_rows = n // LANES          # full 128-lane rows handled by the kernel
    n_main = n_rows * LANES
    total = jnp.float32(0.0)

    # Ragged (<128-element) tail: tiny, computed with plain jnp instead of
    # padding both full arrays through HBM.
    if n_main < n:
        total = total + jnp.sum(
            _bce_terms(flat_o[n_main:], flat_t[n_main:], nw0, nw1, clamp))

    if n_rows > 0:
        # Pick a row tile that satisfies the (8,128) block constraint.
        if n_rows % 8 == 0:
            tile_r = min(max_tile_r, n_rows)       # multiple of 8
        elif n_rows < max_tile_r:
            tile_r = n_rows                        # block == full array dim
        else:
            tile_r = max_tile_r                    # partial last block, masked
        num_blocks = pl.cdiv(n_rows, tile_r)

        o_main = flat_o if n_main == n else flat_o[:n_main]
        t_main = flat_t if n_main == n else flat_t[:n_main]
        o2d = o_main.reshape(n_rows, LANES)
        t2d = t_main.reshape(n_rows, LANES)

        kernel = functools.partial(
            _bce_kernel, nw0=nw0, nw1=nw1, clamp=clamp,
            n_rows=n_rows, tile_r=tile_r, binary_targets=binary_targets)

        in_spec = pl.BlockSpec((tile_r, LANES), lambda i: (i, 0))

        partials = pl.pallas_call(
            kernel,
            out_shape=jax.ShapeDtypeStruct((num_blocks, LANES), jnp.float32),
            grid_spec=pltpu.PrefetchScalarGridSpec(
                num_scalar_prefetch=0,
                grid=(num_blocks,),
                in_specs=[in_spec, in_spec],
                out_specs=pl.BlockSpec((1, LANES), lambda i: (i, 0)),
            ),
            compiler_params=pltpu.CompilerParams(
                dimension_semantics=("parallel",),
                vmem_limit_bytes=48 << 20,
            ),
        )(o2d, t2d)
        total = total + jnp.sum(partials)

    # reduce = torch.mean
    # TODO(synk): only the default mean reduce is supported; custom `reduce`
    # callables from the PyTorch module are not translated.
    return total / jnp.float32(n)


def _bce_ref(output, target, weights=(1.0, 1.0), clamp=True):
    x = jnp.clip(output.astype(jnp.float32), 1e-7, 1.0 - 1e-7)
    log0 = jnp.log(x)
    log1 = jnp.log(1.0 - x)
    if clamp:
        log0 = jnp.maximum(log0, -100.0)
        log1 = jnp.maximum(log1, -100.0)
    t = target.astype(jnp.float32)
    loss = weights[0] * t * log0 + weights[1] * (1 - t) * log1
    return jnp.mean(-loss)


if __name__ == "__main__":
    key = jax.random.PRNGKey(0)
    k1, k2 = jax.random.split(key)

    # NCHW, same convention as the PyTorch module's expected inputs.
    shape = (2, 4, 16, 16)
    output = jax.random.uniform(k1, shape, dtype=jnp.float32)           # predictions in (0, 1)
    target = (jax.random.uniform(k2, shape) > 0.5).astype(jnp.float32)  # binary targets

    loss = jax.block_until_ready(bce_loss(output, target, weights=(1.0, 1.0), clamp=True))
    ref = _bce_ref(output, target, weights=(1.0, 1.0), clamp=True)
    assert jnp.allclose(loss, ref, rtol=1e-5, atol=1e-6), (loss, ref)

    # Binary-targets single-log fast path on the same inputs.
    loss_b = jax.block_until_ready(
        bce_loss(output, target, weights=(1.0, 1.0), clamp=True, binary_targets=True))
    assert jnp.allclose(loss_b, ref, rtol=1e-5, atol=1e-6), (loss_b, ref)

    # Ragged-size check: exercises the wrapper tail path (n % 128 != 0),
    # a non-multiple-of-8 row count, and non-unit weights.
    k3, k4 = jax.random.split(k1)
    shape2 = (3, 5, 7, 11)  # 1155 elements
    out2 = jax.random.uniform(k3, shape2, dtype=jnp.float32)
    tgt2 = (jax.random.uniform(k4, shape2) > 0.5).astype(jnp.float32)
    loss2 = jax.block_until_ready(bce_loss(out2, tgt2, weights=(0.7, 1.3), clamp=True))
    ref2 = _bce_ref(out2, tgt2, weights=(0.7, 1.3), clamp=True)
    assert jnp.allclose(loss2, ref2, rtol=1e-5, atol=1e-6), (loss2, ref2)

    # Multi-block + partial-last-block check (forces the masked last block
    # with garbage rows): 24 rows with a forced tile of 16 rows.
    k5, k6 = jax.random.split(k3)
    shape3 = (3, 1024)  # 3072 elements = 24 rows of 128
    out3 = jax.random.uniform(k5, shape3, dtype=jnp.float32)
    tgt3 = (jax.random.uniform(k6, shape3) > 0.5).astype(jnp.float32)
    loss3 = jax.block_until_ready(
        bce_loss(out3, tgt3, weights=(1.0, 1.0), clamp=True, max_tile_r=16))
    ref3 = _bce_ref(out3, tgt3, weights=(1.0, 1.0), clamp=True)
    assert jnp.allclose(loss3, ref3, rtol=1e-5, atol=1e-6), (loss3, ref3)

    print("KERNEL_OK")
</pallas_src>

<mosaic_0001>
module attributes {stable_mosaic.version = 11 : i64} {
  func.func @_bce_kernel(%arg0: i32, %arg1: memref<16x128xf32, #tpu.memory_space<vmem>>, %arg2: memref<16x128xf32, #tpu.memory_space<vmem>>, %arg3: memref<1x128xf32, #tpu.memory_space<vmem>>) attributes {dimension_semantics = [#tpu.dimension_semantics<parallel>], iteration_bounds = array<i64: 1>, scalar_prefetch = 0 : i64, scratch_operands = 0 : i64, tpu.core_type = #tpu.core_type<tc>, window_params = [{transform_indices = @transform_0, window_bounds = array<i64: 16, 128>}, {transform_indices = @transform_1, window_bounds = array<i64: 16, 128>}, {transform_indices = @transform_2, window_bounds = array<i64: 1, 128>}]} {
    %c0 = arith.constant 0 : index
    %c0_0 = arith.constant 0 : index
    %0 = vector.load %arg1[%c0, %c0_0] : memref<16x128xf32, #tpu.memory_space<vmem>>, vector<16x128xf32>
    %c0_1 = arith.constant 0 : index
    %c0_2 = arith.constant 0 : index
    %1 = vector.load %arg2[%c0_1, %c0_2] : memref<16x128xf32, #tpu.memory_space<vmem>>, vector<16x128xf32>
    %cst = arith.constant 1.000000e-07 : f32
    %cst_3 = arith.constant 0.99999988 : f32
    %2 = vector.broadcast %cst : f32 to vector<16x128xf32>
    %3 = arith.maximumf %2, %0 : vector<16x128xf32>
    %4 = vector.broadcast %cst_3 : f32 to vector<16x128xf32>
    %5 = arith.minimumf %4, %3 : vector<16x128xf32>
    %6 = math.log %5 : vector<16x128xf32>
    %cst_4 = arith.constant 1.000000e+00 : f32
    %7 = vector.broadcast %cst_4 : f32 to vector<16x128xf32>
    %8 = arith.subf %7, %5 : vector<16x128xf32>
    %9 = math.log %8 : vector<16x128xf32>
    %cst_5 = arith.constant -1.000000e+02 : f32
    %10 = vector.broadcast %cst_5 : f32 to vector<16x128xf32>
    %11 = arith.maximumf %6, %10 : vector<16x128xf32>
    %cst_6 = arith.constant -1.000000e+02 : f32
    %12 = vector.broadcast %cst_6 : f32 to vector<16x128xf32>
    %13 = arith.maximumf %9, %12 : vector<16x128xf32>
    %cst_7 = arith.constant -1.000000e+00 : f32
    %14 = vector.broadcast %cst_7 : f32 to vector<16x128xf32>
    %15 = arith.mulf %14, %11 : vector<16x128xf32>
    %cst_8 = arith.constant -1.000000e+00 : f32
    %16 = vector.broadcast %cst_8 : f32 to vector<16x128xf32>
    %17 = arith.mulf %16, %13 : vector<16x128xf32>
    %18 = arith.subf %15, %17 : vector<16x128xf32>
    %19 = arith.mulf %1, %18 : vector<16x128xf32>
    %20 = arith.addf %17, %19 : vector<16x128xf32>
    %c0_i32 = arith.constant 0 : i32
    %21 = arith.cmpi eq, %arg0, %c0_i32 : i32
    %true = arith.constant true
    %22 = arith.xori %21, %true : i1
    %23 = arith.extui %22 : i1 to i32
    %c0_i32_9 = arith.constant 0 : i32
    %24 = arith.cmpi ne, %23, %c0_i32_9 : i32
    scf.if %24 {
      %cst_11 = arith.constant dense<0.000000e+00> : vector<128xf32>
      %27 = vector.multi_reduction <add>, %20, %cst_11 [0] : vector<16x128xf32> to vector<128xf32>
      %28 = vector.shape_cast %27 : vector<128xf32> to vector<1x128xf32>
      %c0_12 = arith.constant 0 : index
      %c0_13 = arith.constant 0 : index
      %29 = vector.load %arg3[%c0_12, %c0_13] : memref<1x128xf32, #tpu.memory_space<vmem>>, vector<1x128xf32>
      tpu.vector_store %arg3[%c0_12, %c0_13], %28 {strides = array<i32>} : memref<1x128xf32, #tpu.memory_space<vmem>>, vector<1x128xf32>,
    } else {
    }
    %25 = arith.extui %21 : i1 to i32
    %c0_i32_10 = arith.constant 0 : i32
    %26 = arith.cmpi ne, %25, %c0_i32_10 : i32
    scf.if %26 {
      %c16_i32 = arith.constant 16 : i32
      %27 = arith.muli %arg0, %c16_i32 : i32
      %c16_i32_11 = arith.constant 16 : i32
      %28 = arith.subi %c16_i32_11, %27 : i32
      %c128_i32 = arith.constant 128 : i32
      %29 = arith.muli %28, %c128_i32 : i32
      %30 = tpu.iota {dimensions = array<i32: 0>} : vector<16x128xi32>
      %31 = tpu.iota {dimensions = array<i32: 1>} : vector<16x128xi32>
      %c128_i32_12 = arith.constant 128 : i32
      %32 = vector.broadcast %c128_i32_12 : i32 to vector<16x128xi32>
      %33 = arith.muli %30, %32 : vector<16x128xi32>
      %34 = arith.addi %33, %31 : vector<16x128xi32>
      %35 = vector.broadcast %29 : i32 to vector<16x128xi32>
      %36 = arith.cmpi slt, %34, %35 : vector<16x128xi32>
      %cst_13 = arith.constant 0.000000e+00 : f32
      %37 = vector.broadcast %cst_13 : f32 to vector<16x128xf32>
      %38 = arith.select %36, %20, %37 : vector<16x128xi1>, vector<16x128xf32>
      %cst_14 = arith.constant dense<0.000000e+00> : vector<128xf32>
      %39 = vector.multi_reduction <add>, %38, %cst_14 [0] : vector<16x128xf32> to vector<128xf32>
      %40 = vector.shape_cast %39 : vector<128xf32> to vector<1x128xf32>
      %c0_15 = arith.constant 0 : index
      %c0_16 = arith.constant 0 : index
      %41 = vector.load %arg3[%c0_15, %c0_16] : memref<1x128xf32, #tpu.memory_space<vmem>>, vector<1x128xf32>
      tpu.vector_store %arg3[%c0_15, %c0_16], %40 {strides = array<i32>} : memref<1x128xf32, #tpu.memory_space<vmem>>, vector<1x128xf32>,
    } else {
    }
    return
  }
  func.func @transform_0(%arg0: i32) -> (i32, i32) {
    %c0_i32 = arith.constant 0 : i32
    %c0_i32_0 = arith.constant 0 : i32
    return %arg0, %c0_i32 : i32, i32
  }
  func.func @transform_1(%arg0: i32) -> (i32, i32) {
    %c0_i32 = arith.constant 0 : i32
    %c0_i32_0 = arith.constant 0 : i32
    return %arg0, %c0_i32 : i32, i32
  }
  func.func @transform_2(%arg0: i32) -> (i32, i32) {
    %c0_i32 = arith.constant 0 : i32
    %c0_i32_0 = arith.constant 0 : i32
    return %arg0, %c0_i32 : i32, i32
  }
}

</mosaic_0001>

<llo_original>
// kernel: tpu_custom_call.1
$region0: #{tpu_custom_call.1}
  #allocation0 [shape = 'u32[]', space=smem, size = 0x4, offset = 0x4, fixed_abs, tag = 'smem constant byte address 0x4 - core index']
  #allocation1 [shape = 'u32[144,128]{1,0:T(1,128)}', space=vmem, size = 0x12000, scoped, tag = 'internal scratch']
  %s0 = inlined_call_operand.hbm [shape: f32[16,128], index: 0, kind: input, shape index: {}]
  %s1 = inlined_call_operand.hbm [shape: f32[16,128], index: 1, kind: input, shape index: {}]
  %s2 = inlined_call_operand.hbm [shape: f32[1,128], index: 2, kind: output, shape index: {}]
  %s3 = sld [smem:[#allocation0]]
  $region34: #{tpu_custom_call.1} parent=0
    _
  %s5 = ssub.s32 1, %s3
  %s6 = scalar_select 0, %s5, %s3
  $region1: #{tpu_custom_call.1} parent=0
    #allocation2 [shape = 'u8[8192]{0}', space=vmem, size = 0x2000, scoped, tag = 'input window, operand 0, single buffered']
    #allocation3 [shape = 's32[1]{0}', space=sflag, size = 0x4, scoped, tag = 'scoped memory for tpu_custom_call.1']
    #allocation4 [shape = 's32[1]{0}', space=sflag, size = 0x4, scoped, tag = 'scoped memory for tpu_custom_call.1']
    #allocation5 [shape = 'u8[8192]{0}', space=vmem, size = 0x2000, scoped, tag = 'input window, operand 1, single buffered']
    #allocation6 [shape = 's32[1]{0}', space=sflag, size = 0x4, scoped, tag = 'scoped memory for tpu_custom_call.1']
    #allocation7 [shape = 'u8[512]{0}', space=vmem, size = 0x400, scoped, tag = 'output window, operand 0, single buffered']
    %7 = vsyncpa [#allocation3], 0
    %8 = vsyncpa [#allocation6], 0
    %9 = vsyncpa [#allocation4], 0
    // Predicated region
    $region2: #{tpu_custom_call.1} parent=1 // pred_check
      _
    $region3: #{tpu_custom_call.1} parent=1 // pred_check_branch
      %11 = sbr.rel (0) target = $region5
    $region4: #{tpu_custom_call.1} parent=1 // pred_region
      %s13 = ssub.s32 256, 256
      %14 = vsyncadd [#allocation3], %s13
      %s15 = sshll.u32 [#allocation2], 4
      %s16 = int_to_ptr.vmem [resolvable:$true] %s15
      %21 = dma.hbm_to_vmem [thread:$0]  %s0, 256, %s16, [#allocation3], 128, 128, 8
    $region5: #{tpu_custom_call.1} parent=1 // pred_fallthru
      _
    // Predicated region
    $region6: #{tpu_custom_call.1} parent=1 // pred_check
      _
    $region7: #{tpu_custom_call.1} parent=1 // pred_check_branch
      %23 = sbr.rel (0) target = $region9
    $region8: #{tpu_custom_call.1} parent=1 // pred_region
      %s25 = ssub.s32 256, 256
      %26 = vsyncadd [#allocation6], %s25
      %s27 = sshll.u32 [#allocation5], 4
      %s28 = int_to_ptr.vmem [resolvable:$true] %s27
      %33 = dma.hbm_to_vmem [thread:$0]  %s1, 256, %s28, [#allocation6], 128, 128, 8
    $region9: #{tpu_custom_call.1} parent=1 // pred_fallthru
      _
    // Predicated region
    $region10: #{tpu_custom_call.1} parent=1 // pred_check
      _
    $region11: #{tpu_custom_call.1} parent=1 // pred_check_branch
      %35 = sbr.rel (0) target = $region13
    $region12: #{tpu_custom_call.1} parent=1 // pred_region
      %36 = dma.done [#allocation3], 256
    $region13: #{tpu_custom_call.1} parent=1 // pred_fallthru
      _
    // Predicated region
    $region14: #{tpu_custom_call.1} parent=1 // pred_check
      _
    $region15: #{tpu_custom_call.1} parent=1 // pred_check_branch
      %38 = sbr.rel (0) target = $region17
    $region16: #{tpu_custom_call.1} parent=1 // pred_region
      %39 = dma.done [#allocation6], 256
    $region17: #{tpu_custom_call.1} parent=1 // pred_fallthru
      _
    %v40 = vld [vmem:[#allocation2] sm:$0xff]
    %v41 = vld [vmem:[#allocation2 + $0x8] sm:$0xff]
    %v42 = vld [vmem:[#allocation5] sm:$0xff]
    %v43 = vld [vmem:[#allocation5 + $0x8] sm:$0xff]
    %v44 = vmax.f32 %v40, 1e-07
    %v45 = vmax.f32 %v41, 1e-07
    %v46 = vmin.f32 %v44, 0.9999999
    %v47 = vmin.f32 %v45, 0.9999999
    %v48 = vlog2.pop %v46
    %v49 = vmul.f32 %v48, 0.6931472
    %v50 = vlog2.pop %v47
    %v51 = vmul.f32 %v50, 0.6931472
    %v52 = vsub.f32 1.0, %v46
    %v53 = vsub.f32 1.0, %v47
    %v54 = vlog2.pop %v52
    %v55 = vmul.f32 %v54, 0.6931472
    %v56 = vlog2.pop %v53
    %v57 = vmul.f32 %v56, 0.6931472
    %v58 = vmax.f32 %v49, -100.0
    %v59 = vmax.f32 %v51, -100.0
    %v60 = vmax.f32 %v55, -100.0
    %v61 = vmax.f32 %v57, -100.0
    %v62 = vmul.f32 %v58, -1.0
    %v63 = vmul.f32 %v59, -1.0
    %v64 = vmul.f32 %v60, -1.0
    %v65 = vmul.f32 %v61, -1.0
    %v66 = vsub.f32 %v62, %v64
    %v67 = vsub.f32 %v63, %v65
    %v68 = vmul.f32 %v42, %v66
    %v69 = vmul.f32 %v43, %v67
    %v70 = vadd.f32 %v64, %v68
    %v71 = vadd.f32 %v65, %v69
    %p72 = scmp.eq.s32.totalorder 0, 0
    %p73 = scmp.ne.s32.totalorder 0, 0
    // Predicated region
    $region18: #{tpu_custom_call.1} parent=1 // pred_check
      %p74 = pneg %p73
    $region19: #{tpu_custom_call.1} parent=1 // pred_check_branch
      %76 = sbr.rel (%p74) target = $region21
    $region20: #{tpu_custom_call.1} parent=1 // pred_region
      %v77 = vadd.f32 %v70, %v71
      %v78 = vrot.slane %v77, 4
      %v79 = vadd.f32 %v77, %v78
      %v80 = vrot.slane %v79, 2
      %v81 = vadd.f32 %v79, %v80
      %v82 = vrot.slane %v81, 1
      %v83 = vadd.f32 %v81, %v82
      %84 = vst [vmem:[#allocation7] sm:$0x1] %v83
    $region21: #{tpu_custom_call.1} parent=1 // pred_fallthru
      _
    // Predicated region
    $region22: #{tpu_custom_call.1} parent=1 // pred_check
      %p85 = pneg %p72
    $region23: #{tpu_custom_call.1} parent=1 // pred_check_branch
      %87 = sbr.rel (%p85) target = $region25
    $region24: #{tpu_custom_call.1} parent=1 // pred_region
      %s88 = smul.u32 0, 16
      %s89 = ssub.s32 16, %s88
      %s90 = smul.u32 %s89, 128
      %v91 = vlaneseq
      %v92 = vshrl.u32 %v91, 7
      %v93 = vadd.s32 %v92, 8
      %v94 = vlaneseq
      %v95 = vand.u32 %v94, 127
      %v96 = vmul.u32 %v92, 128
      %v97 = vmul.u32 %v93, 128
      %v98 = vadd.s32 %v96, %v95
      %v99 = vadd.s32 %v97, %v95
      %v100 = vstv %s90
      %vm101 = vcmp.lt.s32.totalorder %v98, %v100
      %vm102 = vcmp.lt.s32.totalorder %v99, %v100
      %v103 = vsel %vm101, %v70, 0.0
      %v104 = vsel %vm102, %v71, 0.0
      %v105 = vadd.f32 %v103, %v104
      %v106 = vrot.slane %v105, 4
      %v107 = vadd.f32 %v105, %v106
      %v108 = vrot.slane %v107, 2
      %v109 = vadd.f32 %v107, %v108
      %v110 = vrot.slane %v109, 1
      %v111 = vadd.f32 %v109, %v110
      %112 = vst [vmem:[#allocation7] sm:$0x1] %v111
    $region25: #{tpu_custom_call.1} parent=1 // pred_fallthru
      _
    // Predicated region
    $region26: #{tpu_custom_call.1} parent=1 // pred_check
      _
    $region27: #{tpu_custom_call.1} parent=1 // pred_check_branch
      %114 = sbr.rel (0) target = $region29
    $region28: #{tpu_custom_call.1} parent=1 // pred_region
      %s116 = ssub.s32 16, 16
      %117 = vsyncadd [#allocation4], %s116
      %s119 = sshll.u32 [#allocation7], 4
      %s120 = int_to_ptr.vmem [resolvable:$true] %s119
      %122 = dma.vmem_to_hbm [thread:$0]  %s120, 16, %s2, [#allocation4]
    $region29: #{tpu_custom_call.1} parent=1 // pred_fallthru
      _
    // Predicated region
    $region30: #{tpu_custom_call.1} parent=1 // pred_check
      _
    $region31: #{tpu_custom_call.1} parent=1 // pred_check_branch
      %124 = sbr.rel (0) target = $region33
    $region32: #{tpu_custom_call.1} parent=1 // pred_region
      %125 = dma.done [#allocation4], 16
    $region33: #{tpu_custom_call.1} parent=1 // pred_fallthru
      _
    %126 = vsyncpa [#allocation3], 1
    %127 = vsyncpa [#allocation6], 1
    %128 = vsyncpa [#allocation4], 1

</llo_original>
